<compile_context>
chip_gen: v6e
topology: v6e:2x2x1
jax: 0.10.0
libtpu: 0.0.40
codegen_flags: <defaults>
</compile_context>

<pallas_src>
import math
import functools

import jax
import jax.numpy as jnp
from jax.experimental import pallas as pl
from jax.experimental.pallas import tpu as pltpu

NEG_INF = -1000000000.0


def _attention_head_kernel(x_ref, w_ref, b_ref, mask_ref, o_ref, *,
                           inv_sqrt_hidden, hidden_size, block_b, seq_len):
    Bt, S, H = block_b, seq_len, hidden_size

    # Fused QKV projection: one MXU push of (Bt*S, D) against (D, 3*H).
    qkv = jnp.dot(x_ref[...], w_ref[...],
                  preferred_element_type=jnp.float32) + b_ref[...]
    q = qkv[:, 0 * H:1 * H].reshape(Bt, S, H)
    k = qkv[:, 1 * H:2 * H].reshape(Bt, S, H)
    v = qkv[:, 2 * H:3 * H].reshape(Bt, S, H)

    # Q @ K^T contracting the last dims directly (NT matmul, no transpose of K),
    # scaled by the precomputed 1/sqrt(H).
    scores = jnp.einsum('bqd,bkd->bqk', q, k,
                        preferred_element_type=jnp.float32) * inv_sqrt_hidden

    # masked_fill(mask == 0, NEG_INF) — exact reference semantics, built in-kernel.
    scores = jnp.where(mask_ref[...] == 0, jnp.float32(NEG_INF), scores)

    # Numerically stable softmax with an exact denominator divide.
    m = jnp.max(scores, axis=-1, keepdims=True)
    e = jnp.exp(scores - m)
    probs = e / jnp.sum(e, axis=-1, keepdims=True)

    out = jnp.einsum('bqk,bkd->bqd', probs, v,
                     preferred_element_type=jnp.float32)
    o_ref[...] = out.astype(o_ref.dtype)


def _pick_block_b(batch, seq, d, h, vmem_budget_bytes=24 * 1024 * 1024):
    """Batch elements per grid step.

    Default to the whole batch (grid of 1 step) — each grid step carries ~0.35 us
    of fixed overhead, so splitting only pays once a single step would blow a
    conservative VMEM budget. Accounts for x, mask, qkv, scores/probs and output
    (inputs/outputs double-buffered by the pipeline)."""
    per_b = 4 * seq * (
        2 * d                 # x block (double-buffered)
        + 2 * seq             # int mask block (double-buffered)
        + 3 * h               # qkv intermediate
        + 2 * seq             # scores + probs
        + 2 * 2 * h           # q/k/v views + output (double-buffered)
    )
    bb = batch
    while bb > 1 and bb * per_b > vmem_budget_bytes:
        bb -= 1
        while batch % bb:
            bb -= 1
    return max(bb, 1)


def attention_head(x, mask, wq, wk, wv, bq, bk, bv, *, block_b=None):
    """x: (B, S, D) f32, mask: (B, S, S) int32, w*: (D, H) f32, b*: (H,) f32."""
    B, S, D = x.shape
    H = wq.shape[1]

    if block_b is None:
        block_b = _pick_block_b(B, S, D, H)
    assert B % block_b == 0
    num_blocks = B // block_b

    # Pack Q/K/V into a single (D, 3*H) weight slab and a (1, 3*H) bias row.
    w_qkv = jnp.concatenate([wq, wk, wv], axis=1)
    b_qkv = jnp.concatenate([bq, bk, bv]).reshape(1, 3 * H)

    # Wrapper-side flatten of a contiguous array is metadata-only; the kernel
    # then consumes (block_b*S, D) rows directly for the projection matmul.
    x2d = x.reshape(B * S, D)
    mask = mask.astype(jnp.int32)

    kernel = functools.partial(
        _attention_head_kernel,
        inv_sqrt_hidden=1.0 / math.sqrt(H),
        hidden_size=H, block_b=block_b, seq_len=S)

    flops = 2 * B * S * D * (3 * H) + 2 * (2 * B * S * S * H)
    bytes_accessed = 4 * int(x.size + mask.size + w_qkv.size + b_qkv.size
                             + B * S * H)
    cost = pl.CostEstimate(flops=flops, transcendentals=B * S * S,
                           bytes_accessed=bytes_accessed)

    out = pl.pallas_call(
        kernel,
        out_shape=jax.ShapeDtypeStruct((B, S, H), x.dtype),
        grid_spec=pltpu.PrefetchScalarGridSpec(
            num_scalar_prefetch=0,
            grid=(num_blocks,),
            in_specs=[
                pl.BlockSpec((block_b * S, D), lambda b: (b, 0)),     # x (flattened)
                pl.BlockSpec((D, 3 * H), lambda b: (0, 0)),           # W_qkv
                pl.BlockSpec((1, 3 * H), lambda b: (0, 0)),           # b_qkv
                pl.BlockSpec((block_b, S, S), lambda b: (b, 0, 0)),   # int mask
            ],
            out_specs=pl.BlockSpec((block_b, S, H), lambda b: (b, 0, 0)),
        ),
        compiler_params=pltpu.CompilerParams(
            dimension_semantics=("parallel",)),
        cost_estimate=cost,
    )(x2d, w_qkv, b_qkv, mask)

    return out
    # TODO(synk): for large S (hundreds+) tile the key axis flash-style
    # (extra "arbitrary" grid dim with m/l/acc scratch) and cast MXU operands to
    # bf16 (keep the softmax path in f32) to reach v6e/v7x MXU peak.


def attention_head_ref(x, mask, wq, wk, wv, bq, bk, bv):
    """Pure-JAX reference mirroring the PyTorch forward."""
    q = x @ wq + bq
    k = x @ wk + bk
    v = x @ wv + bv
    scores = q @ jnp.swapaxes(k, 1, 2) / math.sqrt(wq.shape[1])
    scores = jnp.where(mask == 0, NEG_INF, scores)
    probs = jax.nn.softmax(scores, axis=-1)
    return probs @ v


if __name__ == "__main__":
    B, S, D, H = 2, 8, 32, 32   # batch, MAX_SEQ_LENGTH, input_size, hidden_size

    key = jax.random.PRNGKey(0)
    kx, kq, kk, kv, kbq, kbk, kbv, km = jax.random.split(key, 8)

    x = jax.random.normal(kx, (B, S, D), dtype=jnp.float32)

    # Deterministic "nn.Linear"-style parameters (weights stored as (D, H)).
    bound = 1.0 / math.sqrt(D)
    wq = jax.random.uniform(kq, (D, H), minval=-bound, maxval=bound, dtype=jnp.float32)
    wk = jax.random.uniform(kk, (D, H), minval=-bound, maxval=bound, dtype=jnp.float32)
    wv = jax.random.uniform(kv, (D, H), minval=-bound, maxval=bound, dtype=jnp.float32)
    bq = jax.random.uniform(kbq, (H,), minval=-bound, maxval=bound, dtype=jnp.float32)
    bk = jax.random.uniform(kbk, (H,), minval=-bound, maxval=bound, dtype=jnp.float32)
    bv = jax.random.uniform(kbv, (H,), minval=-bound, maxval=bound, dtype=jnp.float32)

    # Padding-style mask: per-batch valid lengths, broadcast over queries.
    lengths = jnp.array([S, S // 2], dtype=jnp.int32)
    valid = (jnp.arange(S)[None, :] < lengths[:, None]).astype(jnp.int32)  # (B, S)
    mask = jnp.broadcast_to(valid[:, None, :], (B, S, S)).astype(jnp.int32)

    out = attention_head(x, mask, wq, wk, wv, bq, bk, bv)
    out = jax.block_until_ready(out)

    ref = attention_head_ref(x, mask, wq, wk, wv, bq, bk, bv)
    assert out.shape == (B, S, H)
    assert jnp.allclose(out, ref, atol=1e-4, rtol=1e-4), \
        f"max abs diff {jnp.max(jnp.abs(out - ref))}"

    print("KERNEL_OK")
</pallas_src>

<mosaic_0001>
module attributes {stable_mosaic.version = 11 : i64} {
  func.func @_attention_head_kernel(%arg0: i32, %arg1: memref<16x32xf32, #tpu.memory_space<vmem>>, %arg2: memref<32x96xf32, #tpu.memory_space<vmem>>, %arg3: memref<1x96xf32, #tpu.memory_space<vmem>>, %arg4: memref<2x8x8xi32, #tpu.memory_space<vmem>>, %arg5: memref<2x8x32xf32, #tpu.memory_space<vmem>>) attributes {dimension_semantics = [#tpu.dimension_semantics<parallel>], iteration_bounds = array<i64: 1>, scalar_prefetch = 0 : i64, scratch_operands = 0 : i64, tpu.core_type = #tpu.core_type<tc>, window_params = [{transform_indices = @transform_0, window_bounds = array<i64: 16, 32>}, {pipeline_mode = #tpu.pipeline_mode<synchronous>, transform_indices = @transform_1, window_bounds = array<i64: 32, 96>}, {pipeline_mode = #tpu.pipeline_mode<synchronous>, transform_indices = @transform_2, window_bounds = array<i64: 1, 96>}, {transform_indices = @transform_3, window_bounds = array<i64: 2, 8, 8>}, {transform_indices = @transform_4, window_bounds = array<i64: 2, 8, 32>}]} {
    %c0 = arith.constant 0 : index
    %c0_0 = arith.constant 0 : index
    %0 = vector.load %arg1[%c0, %c0_0] : memref<16x32xf32, #tpu.memory_space<vmem>>, vector<16x32xf32>
    %c0_1 = arith.constant 0 : index
    %c0_2 = arith.constant 0 : index
    %1 = vector.load %arg2[%c0_1, %c0_2] : memref<32x96xf32, #tpu.memory_space<vmem>>, vector<32x96xf32>
    %cst = arith.constant dense<0.000000e+00> : vector<16x96xf32>
    %2 = tpu.matmul %0, %1, %cst {dimension_numbers = #tpu.dot_dimension_numbers<[1], [0], [0], [1], [0, 0, 1, 1], [], []>} : vector<16x32xf32>, vector<32x96xf32>, vector<16x96xf32> -> vector<16x96xf32>
    %c0_3 = arith.constant 0 : index
    %c0_4 = arith.constant 0 : index
    %3 = vector.load %arg3[%c0_3, %c0_4] : memref<1x96xf32, #tpu.memory_space<vmem>>, vector<1x96xf32>
    %4 = vector.broadcast %3 : vector<1x96xf32> to vector<16x96xf32>
    %5 = arith.addf %2, %4 : vector<16x96xf32>
    %6 = vector.extract_strided_slice %5 {offsets = [0, 0], sizes = [16, 32], strides = [1, 1]} : vector<16x96xf32> to vector<16x32xf32>
    %7 = vector.shape_cast %6 : vector<16x32xf32> to vector<2x8x32xf32>
    %8 = vector.extract_strided_slice %5 {offsets = [0, 32], sizes = [16, 32], strides = [1, 1]} : vector<16x96xf32> to vector<16x32xf32>
    %9 = vector.shape_cast %8 : vector<16x32xf32> to vector<2x8x32xf32>
    %10 = vector.extract_strided_slice %5 {offsets = [0, 64], sizes = [16, 32], strides = [1, 1]} : vector<16x96xf32> to vector<16x32xf32>
    %11 = vector.shape_cast %10 : vector<16x32xf32> to vector<2x8x32xf32>
    "tpu.trace_start"() <{level = 10 : i32, message = "bqd,bkd->bqk"}> : () -> ()
    %cst_5 = arith.constant dense<0.000000e+00> : vector<2x8x8xf32>
    %12 = tpu.matmul %7, %9, %cst_5 {dimension_numbers = #tpu.dot_dimension_numbers<[2], [2], [1], [1], [0, 0, 0, 1, 1, 1], [0], [0]>} : vector<2x8x32xf32>, vector<2x8x32xf32>, vector<2x8x8xf32> -> vector<2x8x8xf32>
    "tpu.trace_stop"() : () -> ()
    %cst_6 = arith.constant 0.176776692 : f32
    %13 = vector.broadcast %cst_6 : f32 to vector<2x8x8xf32>
    %14 = arith.mulf %12, %13 : vector<2x8x8xf32>
    %c0_7 = arith.constant 0 : index
    %c0_8 = arith.constant 0 : index
    %c0_9 = arith.constant 0 : index
    %15 = vector.load %arg4[%c0_7, %c0_8, %c0_9] : memref<2x8x8xi32, #tpu.memory_space<vmem>>, vector<2x8x8xi32>
    %c0_i32 = arith.constant 0 : i32
    %16 = vector.broadcast %c0_i32 : i32 to vector<2x8x8xi32>
    %17 = arith.cmpi eq, %15, %16 : vector<2x8x8xi32>
    %cst_10 = arith.constant -1.000000e+09 : f32
    %18 = vector.broadcast %cst_10 : f32 to vector<2x8x8xf32>
    %19 = arith.select %17, %18, %14 : vector<2x8x8xi1>, vector<2x8x8xf32>
    %cst_11 = arith.constant dense<0xFF800000> : vector<2x8xf32>
    %20 = vector.multi_reduction <maximumf>, %19, %cst_11 [2] : vector<2x8x8xf32> to vector<2x8xf32>
    %21 = vector.shape_cast %20 : vector<2x8xf32> to vector<2x8x1xf32>
    %22 = vector.broadcast %21 : vector<2x8x1xf32> to vector<2x8x8xf32>
    %23 = arith.subf %19, %22 : vector<2x8x8xf32>
    %24 = math.exp %23 : vector<2x8x8xf32>
    %cst_12 = arith.constant dense<0.000000e+00> : vector<2x8xf32>
    %25 = vector.multi_reduction <add>, %24, %cst_12 [2] : vector<2x8x8xf32> to vector<2x8xf32>
    %26 = vector.shape_cast %25 : vector<2x8xf32> to vector<2x8x1xf32>
    %27 = vector.broadcast %26 : vector<2x8x1xf32> to vector<2x8x8xf32>
    %28 = arith.divf %24, %27 : vector<2x8x8xf32>
    "tpu.trace_start"() <{level = 10 : i32, message = "bqk,bkd->bqd"}> : () -> ()
    %cst_13 = arith.constant dense<0.000000e+00> : vector<2x8x32xf32>
    %29 = tpu.matmul %28, %11, %cst_13 {dimension_numbers = #tpu.dot_dimension_numbers<[2], [1], [1], [2], [0, 0, 0, 1, 1, 2], [0], [0]>} : vector<2x8x8xf32>, vector<2x8x32xf32>, vector<2x8x32xf32> -> vector<2x8x32xf32>
    "tpu.trace_stop"() : () -> ()
    %c0_14 = arith.constant 0 : index
    %c0_15 = arith.constant 0 : index
    %c0_16 = arith.constant 0 : index
    %30 = vector.load %arg5[%c0_14, %c0_15, %c0_16] : memref<2x8x32xf32, #tpu.memory_space<vmem>>, vector<2x8x32xf32>
    tpu.vector_store %arg5[%c0_14, %c0_15, %c0_16], %29 {strides = array<i32>} : memref<2x8x32xf32, #tpu.memory_space<vmem>>, vector<2x8x32xf32>,
    return
  }
  func.func @transform_0(%arg0: i32) -> (i32, i32) {
    %c0_i32 = arith.constant 0 : i32
    %c0_i32_0 = arith.constant 0 : i32
    return %arg0, %c0_i32 : i32, i32
  }
  func.func @transform_1(%arg0: i32) -> (i32, i32) {
    %c0_i32 = arith.constant 0 : i32
    %c0_i32_0 = arith.constant 0 : i32
    %c0_i32_1 = arith.constant 0 : i32
    return %c0_i32, %c0_i32_0 : i32, i32
  }
  func.func @transform_2(%arg0: i32) -> (i32, i32) {
    %c0_i32 = arith.constant 0 : i32
    %c0_i32_0 = arith.constant 0 : i32
    %c0_i32_1 = arith.constant 0 : i32
    return %c0_i32, %c0_i32_0 : i32, i32
  }
  func.func @transform_3(%arg0: i32) -> (i32, i32, i32) {
    %c0_i32 = arith.constant 0 : i32
    %c0_i32_0 = arith.constant 0 : i32
    %c0_i32_1 = arith.constant 0 : i32
    return %arg0, %c0_i32, %c0_i32_0 : i32, i32, i32
  }
  func.func @transform_4(%arg0: i32) -> (i32, i32, i32) {
    %c0_i32 = arith.constant 0 : i32
    %c0_i32_0 = arith.constant 0 : i32
    %c0_i32_1 = arith.constant 0 : i32
    return %arg0, %c0_i32, %c0_i32_0 : i32, i32, i32
  }
}

</mosaic_0001>

<llo_original>
// kernel: tpu_custom_call.1
$region0: #{tpu_custom_call.1}
  #allocation0 [shape = 'u32[]', space=smem, size = 0x4, offset = 0x4, fixed_abs, tag = 'smem constant byte address 0x4 - core index']
  #allocation1 [shape = 'u32[144,128]{1,0:T(1,128)}', space=vmem, size = 0x12000, scoped, tag = 'internal scratch']
  %s0 = inlined_call_operand.hbm [shape: f32[16,32], index: 0, kind: input, shape index: {}]
  %s1 = inlined_call_operand.hbm [shape: f32[32,96], index: 1, kind: input, shape index: {}]
  %s2 = inlined_call_operand.vmem [shape: f32[1,96], index: 2, kind: input, shape index: {}]
  %s3 = inlined_call_operand.hbm [shape: s32[2,8,8], index: 3, kind: input, shape index: {}]
  %s4 = inlined_call_operand.hbm [shape: f32[2,8,32], index: 4, kind: output, shape index: {}]
  %s5 = sld [smem:[#allocation0]]
  $region38: #{tpu_custom_call.1} parent=0
    _
  %s7 = ssub.s32 1, %s5
  %s8 = scalar_select 0, %s7, %s5
  $region1: #{tpu_custom_call.1} parent=0
    #allocation2 [shape = 'u8[8192]{0}', space=vmem, size = 0x2000, scoped, tag = 'input window, operand 0, single buffered']
    #allocation3 [shape = 's32[1]{0}', space=sflag, size = 0x4, scoped, tag = 'scoped memory for tpu_custom_call.1']
    #allocation4 [shape = 's32[1]{0}', space=sflag, size = 0x4, scoped, tag = 'scoped memory for tpu_custom_call.1']
    #allocation5 [shape = 'u8[16384]{0}', space=vmem, size = 0x4000, scoped, tag = 'input window, operand 1, single buffered']
    #allocation6 [shape = 's32[1]{0}', space=sflag, size = 0x4, scoped, tag = 'scoped memory for tpu_custom_call.1']
    #allocation7 [shape = 'u8[8192]{0}', space=vmem, size = 0x2000, scoped, tag = 'input window, operand 3, single buffered']
    #allocation8 [shape = 'u8[8192]{0}', space=vmem, size = 0x2000, scoped, tag = 'output window, operand 0, single buffered']
    %9 = vsyncpa [#allocation3], 0
    %10 = vsyncpa [#allocation6], 0
    %11 = vsyncpa [#allocation4], 0
    // Predicated region
    $region2: #{tpu_custom_call.1} parent=1 // pred_check
      _
    $region3: #{tpu_custom_call.1} parent=1 // pred_check_branch
      %13 = sbr.rel (0) target = $region5
    $region4: #{tpu_custom_call.1} parent=1 // pred_region
      %s15 = ssub.s32 256, 256
      %16 = vsyncadd [#allocation3], %s15
      %s17 = sshll.u32 [#allocation2], 4
      %s18 = int_to_ptr.vmem [resolvable:$true] %s17
      %23 = dma.hbm_to_vmem [thread:$0]  %s0, 256, %s18, [#allocation3], 128, 128, 8
    $region5: #{tpu_custom_call.1} parent=1 // pred_fallthru
      _
    // Predicated region
    $region6: #{tpu_custom_call.1} parent=1 // pred_check
      _
    $region7: #{tpu_custom_call.1} parent=1 // pred_check_branch
      %25 = sbr.rel (0) target = $region9
    $region8: #{tpu_custom_call.1} parent=1 // pred_region
      %s27 = ssub.s32 512, 512
      %28 = vsyncadd [#allocation6], %s27
      %s29 = sshll.u32 [#allocation5], 4
      %s30 = int_to_ptr.vmem [resolvable:$true] %s29
      %35 = dma.hbm_to_vmem [thread:$0]  %s1, 512, %s30, [#allocation6], 128, 128, 8
    $region9: #{tpu_custom_call.1} parent=1 // pred_fallthru
      _
    // Predicated region
    $region10: #{tpu_custom_call.1} parent=1 // pred_check
      _
    $region11: #{tpu_custom_call.1} parent=1 // pred_check_branch
      %37 = sbr.rel (0) target = $region13
    $region12: #{tpu_custom_call.1} parent=1 // pred_region
      _
    $region13: #{tpu_custom_call.1} parent=1 // pred_fallthru
      _
    // Predicated region
    $region14: #{tpu_custom_call.1} parent=1 // pred_check
      _
    $region15: #{tpu_custom_call.1} parent=1 // pred_check_branch
      %39 = sbr.rel (0) target = $region17
    $region16: #{tpu_custom_call.1} parent=1 // pred_region
      %s41 = ssub.s32 256, 256
      %42 = vsyncadd [#allocation6], %s41
      %s43 = sshll.u32 [#allocation7], 4
      %s44 = int_to_ptr.vmem [resolvable:$true] %s43
      %49 = dma.hbm_to_vmem [thread:$0]  %s3, 256, %s44, [#allocation6], 128, 128, 8
    $region17: #{tpu_custom_call.1} parent=1 // pred_fallthru
      _
    // Predicated region
    $region18: #{tpu_custom_call.1} parent=1 // pred_check
      _
    $region19: #{tpu_custom_call.1} parent=1 // pred_check_branch
      %51 = sbr.rel (0) target = $region21
    $region20: #{tpu_custom_call.1} parent=1 // pred_region
      %52 = dma.done [#allocation3], 256
    $region21: #{tpu_custom_call.1} parent=1 // pred_fallthru
      _
    // Predicated region
    $region22: #{tpu_custom_call.1} parent=1 // pred_check
      _
    $region23: #{tpu_custom_call.1} parent=1 // pred_check_branch
      %54 = sbr.rel (0) target = $region25
    $region24: #{tpu_custom_call.1} parent=1 // pred_region
      %55 = dma.done [#allocation6], 512
    $region25: #{tpu_custom_call.1} parent=1 // pred_fallthru
      _
    // Predicated region
    $region26: #{tpu_custom_call.1} parent=1 // pred_check
      _
    $region27: #{tpu_custom_call.1} parent=1 // pred_check_branch
      %57 = sbr.rel (0) target = $region29
    $region28: #{tpu_custom_call.1} parent=1 // pred_region
      %58 = dma.done [#allocation6], 256
    $region29: #{tpu_custom_call.1} parent=1 // pred_fallthru
      _
    %v59 = vld [vmem:[#allocation2] sm:$0xff]
    %v60 = vld [vmem:[#allocation2 + $0x8] sm:$0xff]
    %v61 = vld [vmem:[#allocation5] sm:$0xff]
    %v62 = vld [vmem:[#allocation5 + $0x8] sm:$0xff]
    %v63 = vld [vmem:[#allocation5 + $0x10] sm:$0xff]
    %v64 = vld [vmem:[#allocation5 + $0x18] sm:$0xff]
    %v65 = vld [vmem:[%s2] sm:$0x1]
    %v67 = vlaneseq
    %v68 = vshrl.u32 %v67, 7
    %v69 = vsub.s32 0, %v68
    %v70 = vrot.slane %v65, %v69
    %vm72 = vcmask 261120
    %v74 = vsel %vm72, %v59, 0
    %v77 = vsel %vm72, %v60, 0
    %79 = vmatprep.subr.mxu0 0.0
    %80 = vmatpush1.msra.mxu0 0.0
    %81 = vmatprep.subr.mxu0 0.0
    %82 = vmatpush1.msra.mxu0 0.0
    %83 = vmatprep.subr.mxu0 0.0
    %84 = vmatpush1.msra.mxu0 0.0
    %85 = vmatprep.subr.mxu0 0.0
    %86 = vmatpush1.msra.mxu0 0.0
    %87 = vmatprep.subr.mxu0 0.0
    %88 = vmatpush1.msra.mxu0 0.0
    %89 = vmatprep.subr.mxu0 0.0
    %90 = vmatpush1.msra.mxu0 0.0
    %91 = vmatprep.subr.mxu0 0.0
    %92 = vmatpush1.msra.mxu0 0.0
    %93 = vmatprep.subr.mxu0 0.0
    %94 = vmatpush1.msra.mxu0 0.0
    %95 = vmatprep.subr.mxu0 0.0
    %96 = vmatpush1.msra.mxu0 0.0
    %97 = vmatprep.subr.mxu0 0.0
    %98 = vmatpush1.msra.mxu0 0.0
    %99 = vmatprep.subr.mxu0 0.0
    %100 = vmatpush1.msra.mxu0 0.0
    %101 = vmatprep.subr.mxu0 0.0
    %102 = vmatpush1.msra.mxu0 0.0
    %103 = vmatprep.subr.mxu0 0.0
    %104 = vmatpush1.msra.mxu0 %v64
    %105 = vmatprep.subr.mxu0 0.0
    %106 = vmatpush1.msra.mxu0 %v63
    %107 = vmatprep.subr.mxu0 0.0
    %108 = vmatpush1.msra.mxu0 %v62
    %109 = vmatprep.subr.mxu0 0.0
    %110 = vmatpush1.msra.mxu0 %v61
    %111 = vmatprep.subr.mxu0 0.0
    %112 = vmatpush2.msra.mxu0 0.0
    %113 = vmatprep.subr.mxu0 0.0
    %114 = vmatpush2.msra.mxu0 0.0
    %115 = vmatprep.subr.mxu0 0.0
    %116 = vmatpush2.msra.mxu0 0.0
    %117 = vmatprep.subr.mxu0 0.0
    %118 = vmatpush2.msra.mxu0 0.0
    %119 = vmatprep.subr.mxu0 0.0
    %120 = vmatpush2.msra.mxu0 0.0
    %121 = vmatprep.subr.mxu0 0.0
    %122 = vmatpush2.msra.mxu0 0.0
    %123 = vmatprep.subr.mxu0 0.0
    %124 = vmatpush2.msra.mxu0 0.0
    %125 = vmatprep.subr.mxu0 0.0
    %126 = vmatpush2.msra.mxu0 0.0
    %127 = vmatprep.subr.mxu0 0.0
    %128 = vmatpush2.msra.mxu0 0.0
    %129 = vmatprep.subr.mxu0 0.0
    %130 = vmatpush2.msra.mxu0 0.0
    %131 = vmatprep.subr.mxu0 0.0
    %132 = vmatpush2.msra.mxu0 0.0
    %133 = vmatprep.subr.mxu0 0.0
    %134 = vmatpush2.msra.mxu0 0.0
    %135 = vmatprep.subr.mxu0 0.0
    %136 = vmatpush2.msra.mxu0 0.0
    %137 = vmatprep.subr.mxu0 0.0
    %138 = vmatpush2.msra.mxu0 0.0
    %139 = vmatprep.subr.mxu0 0.0
    %140 = vmatpush2.msra.mxu0 0.0
    %141 = vmatprep.subr.mxu0 0.0
    %142 = vmatpush2.msra.mxu0 0.0
    %143 = vmatprep.mubr.f32.mxu0 0.0
    %144 = vmatmul.mubr.f32.gmra.mxu0 %v74
    %v145 = vpop.f32.mrf.mxu0
    %v146 = vadd.f32 %v70, %v145
    %v147 = vpop.f32.mrf.mxu0
    %148 = vmatprep.mubr.f32.mxu0 0.0
    %149 = vmatmul.mubr.f32.gmra.mxu0 %v77
    %v150 = vpop.f32.mrf.mxu0
    %v151 = vadd.f32 %v70, %v150
    %v152 = vpop.f32.mrf.mxu0
    %153 = vdwg.mxu0
    %155 = vrot.lane.b32.xlu0 %v146, 96
    %v156 = vpop.permute.xlu0 %155
    %v157 = vsel %vm72, %v146, 0
    %v159 = vsel %vm72, %v156, 0
    %161 = vmatprep.subr.mxu0 0.0
    %162 = vmatpush1.xpose.msra.mxu0 0.0
    %163 = vmatprep.subr.mxu0 0.0
    %164 = vmatpush1.xpose.msra.mxu0 0.0
    %165 = vmatprep.subr.mxu0 0.0
    %166 = vmatpush1.xpose.msra.mxu0 0.0
    %167 = vmatprep.subr.mxu0 0.0
    %168 = vmatpush1.xpose.msra.mxu0 0.0
    %169 = vmatprep.subr.mxu0 0.0
    %170 = vmatpush1.xpose.msra.mxu0 0.0
    %171 = vmatprep.subr.mxu0 0.0
    %172 = vmatpush1.xpose.msra.mxu0 0.0
    %173 = vmatprep.subr.mxu0 0.0
    %174 = vmatpush1.xpose.msra.mxu0 0.0
    %175 = vmatprep.subr.mxu0 0.0
    %176 = vmatpush1.xpose.msra.mxu0 0.0
    %177 = vmatprep.subr.mxu0 0.0
    %178 = vmatpush1.xpose.msra.mxu0 0.0
    %179 = vmatprep.subr.mxu0 0.0
    %180 = vmatpush1.xpose.msra.mxu0 0.0
    %181 = vmatprep.subr.mxu0 0.0
    %182 = vmatpush1.xpose.msra.mxu0 0.0
    %183 = vmatprep.subr.mxu0 0.0
    %184 = vmatpush1.xpose.msra.mxu0 0.0
    %185 = vmatprep.subr.mxu0 0.0
    %186 = vmatpush1.xpose.msra.mxu0 0.0
    %187 = vmatprep.subr.mxu0 0.0
    %188 = vmatpush1.xpose.msra.mxu0 0.0
    %189 = vmatprep.subr.mxu0 0.0
    %190 = vmatpush1.xpose.msra.mxu0 0.0
    %191 = vmatprep.subr.mxu0 0.0
    %192 = vmatpush1.xpose.msra.mxu0 %v159
    %193 = vmatprep.subr.mxu0 0.0
    %194 = vmatpush2.xpose.msra.mxu0 0.0
    %195 = vmatprep.subr.mxu0 0.0
    %196 = vmatpush2.xpose.msra.mxu0 0.0
    %197 = vmatprep.subr.mxu0 0.0
    %198 = vmatpush2.xpose.msra.mxu0 0.0
    %199 = vmatprep.subr.mxu0 0.0
    %200 = vmatpush2.xpose.msra.mxu0 0.0
    %201 = vmatprep.subr.mxu0 0.0
    %202 = vmatpush2.xpose.msra.mxu0 0.0
    %203 = vmatprep.subr.mxu0 0.0
    %204 = vmatpush2.xpose.msra.mxu0 0.0
    %205 = vmatprep.subr.mxu0 0.0
    %206 = vmatpush2.xpose.msra.mxu0 0.0
    %207 = vmatprep.subr.mxu0 0.0
    %208 = vmatpush2.xpose.msra.mxu0 0.0
    %209 = vmatprep.subr.mxu0 0.0
    %210 = vmatpush2.xpose.msra.mxu0 0.0
    %211 = vmatprep.subr.mxu0 0.0
    %212 = vmatpush2.xpose.msra.mxu0 0.0
    %213 = vmatprep.subr.mxu0 0.0
    %214 = vmatpush2.xpose.msra.mxu0 0.0
    %215 = vmatprep.subr.mxu0 0.0
    %216 = vmatpush2.xpose.msra.mxu0 0.0
    %217 = vmatprep.subr.mxu0 0.0
    %218 = vmatpush2.xpose.msra.mxu0 0.0
    %219 = vmatprep.subr.mxu0 0.0
    %220 = vmatpush2.xpose.msra.mxu0 0.0
    %221 = vmatprep.subr.mxu0 0.0
    %222 = vmatpush2.xpose.msra.mxu0 0.0
    %223 = vmatprep.subr.mxu0 0.0
    %224 = vmatpush2.xpose.msra.mxu0 0.0
    %225 = vmatprep.mubr.f32.mxu0 0.0
    %226 = vmatmul.mubr.f32.gmra.mxu0 %v157
    %v227 = vpop.f32.mrf.mxu0
    %v228 = vadd.f32 0.0, %v227
    %v229 = vpop.f32.mrf.mxu0
    %230 = vdwg.mxu0
    %232 = vrot.lane.b32.xlu0 %v151, 96
    %v233 = vpop.permute.xlu0 %232
    %v234 = vsel %vm72, %v151, 0
    %v236 = vsel %vm72, %v233, 0
    %238 = vmatprep.subr.mxu0 0.0
    %239 = vmatpush1.xpose.msra.mxu0 0.0
    %240 = vmatprep.subr.mxu0 0.0
    %241 = vmatpush1.xpose.msra.mxu0 0.0
    %242 = vmatprep.subr.mxu0 0.0
    %243 = vmatpush1.xpose.msra.mxu0 0.0
    %244 = vmatprep.subr.mxu0 0.0
    %245 = vmatpush1.xpose.msra.mxu0 0.0
    %246 = vmatprep.subr.mxu0 0.0
    %247 = vmatpush1.xpose.msra.mxu0 0.0
    %248 = vmatprep.subr.mxu0 0.0
    %249 = vmatpush1.xpose.msra.mxu0 0.0
    %250 = vmatprep.subr.mxu0 0.0
    %251 = vmatpush1.xpose.msra.mxu0 0.0
    %252 = vmatprep.subr.mxu0 0.0
    %253 = vmatpush1.xpose.msra.mxu0 0.0
    %254 = vmatprep.subr.mxu0 0.0
    %255 = vmatpush1.xpose.msra.mxu0 0.0
    %256 = vmatprep.subr.mxu0 0.0
    %257 = vmatpush1.xpose.msra.mxu0 0.0
    %258 = vmatprep.subr.mxu0 0.0
    %259 = vmatpush1.xpose.msra.mxu0 0.0
    %260 = vmatprep.subr.mxu0 0.0
    %261 = vmatpush1.xpose.msra.mxu0 0.0
    %262 = vmatprep.subr.mxu0 0.0
    %263 = vmatpush1.xpose.msra.mxu0 0.0
    %264 = vmatprep.subr.mxu0 0.0
    %265 = vmatpush1.xpose.msra.mxu0 0.0
    %266 = vmatprep.subr.mxu0 0.0
    %267 = vmatpush1.xpose.msra.mxu0 0.0
    %268 = vmatprep.subr.mxu0 0.0
    %269 = vmatpush1.xpose.msra.mxu0 %v236
    %270 = vmatprep.subr.mxu0 0.0
    %271 = vmatpush2.xpose.msra.mxu0 0.0
    %272 = vmatprep.subr.mxu0 0.0
    %273 = vmatpush2.xpose.msra.mxu0 0.0
    %274 = vmatprep.subr.mxu0 0.0
    %275 = vmatpush2.xpose.msra.mxu0 0.0
    %276 = vmatprep.subr.mxu0 0.0
    %277 = vmatpush2.xpose.msra.mxu0 0.0
    %278 = vmatprep.subr.mxu0 0.0
    %279 = vmatpush2.xpose.msra.mxu0 0.0
    %280 = vmatprep.subr.mxu0 0.0
    %281 = vmatpush2.xpose.msra.mxu0 0.0
    %282 = vmatprep.subr.mxu0 0.0
    %283 = vmatpush2.xpose.msra.mxu0 0.0
    %284 = vmatprep.subr.mxu0 0.0
    %285 = vmatpush2.xpose.msra.mxu0 0.0
    %286 = vmatprep.subr.mxu0 0.0
    %287 = vmatpush2.xpose.msra.mxu0 0.0
    %288 = vmatprep.subr.mxu0 0.0
    %289 = vmatpush2.xpose.msra.mxu0 0.0
    %290 = vmatprep.subr.mxu0 0.0
    %291 = vmatpush2.xpose.msra.mxu0 0.0
    %292 = vmatprep.subr.mxu0 0.0
    %293 = vmatpush2.xpose.msra.mxu0 0.0
    %294 = vmatprep.subr.mxu0 0.0
    %295 = vmatpush2.xpose.msra.mxu0 0.0
    %296 = vmatprep.subr.mxu0 0.0
    %297 = vmatpush2.xpose.msra.mxu0 0.0
    %298 = vmatprep.subr.mxu0 0.0
    %299 = vmatpush2.xpose.msra.mxu0 0.0
    %300 = vmatprep.subr.mxu0 0.0
    %301 = vmatpush2.xpose.msra.mxu0 0.0
    %302 = vmatprep.mubr.f32.mxu0 0.0
    %303 = vmatmul.mubr.f32.gmra.mxu0 %v234
    %v304 = vpop.f32.mrf.mxu0
    %v305 = vadd.f32 0.0, %v304
    %v306 = vpop.f32.mrf.mxu0
    %307 = vdwg.mxu0
    %v308 = vmul.f32 %v228, 0.17677669
    %v309 = vmul.f32 %v305, 0.17677669
    %v310 = vld [vmem:[#allocation7] sm:$0xff]
    %v311 = vld [vmem:[#allocation7 + $0x8] sm:$0xff]
    %vm312 = vcmp.eq.s32.totalorder %v310, 0
    %vm313 = vcmp.eq.s32.totalorder %v311, 0
    %v314 = vsel %vm312, -1e+09, %v308
    %v315 = vsel %vm313, -1e+09, %v309
    %vm316 = vcmask 64512
    %v317 = vsel %vm316, %v314, -inf
    %318 = vmax.xlane.f32.xlu0 %v317
    %v319 = vpop.xlane.xlu0 %318
    %v320 = vsel %vm316, %v315, -inf
    %321 = vmax.xlane.f32.xlu0 %v320
    %v322 = vpop.xlane.xlu0 %321
    %v323 = vsub.f32 %v314, %v319
    %v324 = vsub.f32 %v315, %v322
    %v325 = vmul.f32 %v323, 1.442695
    %v326 = vpow.pop %v325
    %v327 = vmul.f32 %v324, 1.442695
    %v328 = vpow.pop %v327
    %v329 = vsel %vm316, %v326, 0.0
    %330 = vadd.xlane.f32.xlu0 %v329
    %v331 = vpop.xlane.xlu0 %330
    %v332 = vsel %vm316, %v328, 0.0
    %333 = vadd.xlane.f32.xlu0 %v332
    %v334 = vpop.xlane.xlu0 %333
    %v335 = vrcp.pop %v331
    %v336 = vmul.f32 %v326, %v335
    %v337 = vrcp.pop %v334
    %v338 = vmul.f32 %v328, %v337
    %339 = vrot.lane.b32.xlu0 %v146, 64
    %v340 = vpop.permute.xlu0 %339
    %v343 = vsel %vm316, %v336, 0
    %345 = vmatprep.subr.mxu0 0.0
    %346 = vmatpush1.msra.mxu0 0.0
    %347 = vmatprep.subr.mxu0 0.0
    %348 = vmatpush1.msra.mxu0 0.0
    %349 = vmatprep.subr.mxu0 0.0
    %350 = vmatpush1.msra.mxu0 0.0
    %351 = vmatprep.subr.mxu0 0.0
    %352 = vmatpush1.msra.mxu0 0.0
    %353 = vmatprep.subr.mxu0 0.0
    %354 = vmatpush1.msra.mxu0 0.0
    %355 = vmatprep.subr.mxu0 0.0
    %356 = vmatpush1.msra.mxu0 0.0
    %357 = vmatprep.subr.mxu0 0.0
    %358 = vmatpush1.msra.mxu0 0.0
    %359 = vmatprep.subr.mxu0 0.0
    %360 = vmatpush1.msra.mxu0 0.0
    %361 = vmatprep.subr.mxu0 0.0
    %362 = vmatpush1.msra.mxu0 0.0
    %363 = vmatprep.subr.mxu0 0.0
    %364 = vmatpush1.msra.mxu0 0.0
    %365 = vmatprep.subr.mxu0 0.0
    %366 = vmatpush1.msra.mxu0 0.0
    %367 = vmatprep.subr.mxu0 0.0
    %368 = vmatpush1.msra.mxu0 0.0
    %369 = vmatprep.subr.mxu0 0.0
    %370 = vmatpush1.msra.mxu0 0.0
    %371 = vmatprep.subr.mxu0 0.0
    %372 = vmatpush1.msra.mxu0 0.0
    %373 = vmatprep.subr.mxu0 0.0
    %374 = vmatpush1.msra.mxu0 0.0
    %375 = vmatprep.subr.mxu0 0.0
    %376 = vmatpush1.msra.mxu0 %v340
    %377 = vmatprep.subr.mxu0 0.0
    %378 = vmatpush2.msra.mxu0 0.0
    %379 = vmatprep.subr.mxu0 0.0
    %380 = vmatpush2.msra.mxu0 0.0
    %381 = vmatprep.subr.mxu0 0.0
    %382 = vmatpush2.msra.mxu0 0.0
    %383 = vmatprep.subr.mxu0 0.0
    %384 = vmatpush2.msra.mxu0 0.0
    %385 = vmatprep.subr.mxu0 0.0
    %386 = vmatpush2.msra.mxu0 0.0
    %387 = vmatprep.subr.mxu0 0.0
    %388 = vmatpush2.msra.mxu0 0.0
    %389 = vmatprep.subr.mxu0 0.0
    %390 = vmatpush2.msra.mxu0 0.0
    %391 = vmatprep.subr.mxu0 0.0
    %392 = vmatpush2.msra.mxu0 0.0
    %393 = vmatprep.subr.mxu0 0.0
    %394 = vmatpush2.msra.mxu0 0.0
    %395 = vmatprep.subr.mxu0 0.0
    %396 = vmatpush2.msra.mxu0 0.0
    %397 = vmatprep.subr.mxu0 0.0
    %398 = vmatpush2.msra.mxu0 0.0
    %399 = vmatprep.subr.mxu0 0.0
    %400 = vmatpush2.msra.mxu0 0.0
    %401 = vmatprep.subr.mxu0 0.0
    %402 = vmatpush2.msra.mxu0 0.0
    %403 = vmatprep.subr.mxu0 0.0
    %404 = vmatpush2.msra.mxu0 0.0
    %405 = vmatprep.subr.mxu0 0.0
    %406 = vmatpush2.msra.mxu0 0.0
    %407 = vmatprep.subr.mxu0 0.0
    %408 = vmatpush2.msra.mxu0 0.0
    %409 = vmatprep.mubr.f32.mxu0 0.0
    %410 = vmatmul.mubr.f32.gmra.mxu0 %v343
    %v411 = vpop.f32.mrf.mxu0
    %v412 = vadd.f32 0.0, %v411
    %v413 = vpop.f32.mrf.mxu0
    %414 = vdwg.mxu0
    %415 = vrot.lane.b32.xlu0 %v151, 64
    %v416 = vpop.permute.xlu0 %415
    %v419 = vsel %vm316, %v338, 0
    %421 = vmatprep.subr.mxu0 0.0
    %422 = vmatpush1.msra.mxu0 0.0
    %423 = vmatprep.subr.mxu0 0.0
    %424 = vmatpush1.msra.mxu0 0.0
    %425 = vmatprep.subr.mxu0 0.0
    %426 = vmatpush1.msra.mxu0 0.0
    %427 = vmatprep.subr.mxu0 0.0
    %428 = vmatpush1.msra.mxu0 0.0
    %429 = vmatprep.subr.mxu0 0.0
    %430 = vmatpush1.msra.mxu0 0.0
    %431 = vmatprep.subr.mxu0 0.0
    %432 = vmatpush1.msra.mxu0 0.0
    %433 = vmatprep.subr.mxu0 0.0
    %434 = vmatpush1.msra.mxu0 0.0
    %435 = vmatprep.subr.mxu0 0.0
    %436 = vmatpush1.msra.mxu0 0.0
    %437 = vmatprep.subr.mxu0 0.0
    %438 = vmatpush1.msra.mxu0 0.0
    %439 = vmatprep.subr.mxu0 0.0
    %440 = vmatpush1.msra.mxu0 0.0
    %441 = vmatprep.subr.mxu0 0.0
    %442 = vmatpush1.msra.mxu0 0.0
    %443 = vmatprep.subr.mxu0 0.0
    %444 = vmatpush1.msra.mxu0 0.0
    %445 = vmatprep.subr.mxu0 0.0
    %446 = vmatpush1.msra.mxu0 0.0
    %447 = vmatprep.subr.mxu0 0.0
    %448 = vmatpush1.msra.mxu0 0.0
    %449 = vmatprep.subr.mxu0 0.0
    %450 = vmatpush1.msra.mxu0 0.0
    %451 = vmatprep.subr.mxu0 0.0
    %452 = vmatpush1.msra.mxu0 %v416
    %453 = vmatprep.subr.mxu0 0.0
    %454 = vmatpush2.msra.mxu0 0.0
    %455 = vmatprep.subr.mxu0 0.0
    %456 = vmatpush2.msra.mxu0 0.0
    %457 = vmatprep.subr.mxu0 0.0
    %458 = vmatpush2.msra.mxu0 0.0
    %459 = vmatprep.subr.mxu0 0.0
    %460 = vmatpush2.msra.mxu0 0.0
    %461 = vmatprep.subr.mxu0 0.0
    %462 = vmatpush2.msra.mxu0 0.0
    %463 = vmatprep.subr.mxu0 0.0
    %464 = vmatpush2.msra.mxu0 0.0
    %465 = vmatprep.subr.mxu0 0.0
    %466 = vmatpush2.msra.mxu0 0.0
    %467 = vmatprep.subr.mxu0 0.0
    %468 = vmatpush2.msra.mxu0 0.0
    %469 = vmatprep.subr.mxu0 0.0
    %470 = vmatpush2.msra.mxu0 0.0
    %471 = vmatprep.subr.mxu0 0.0
    %472 = vmatpush2.msra.mxu0 0.0
    %473 = vmatprep.subr.mxu0 0.0
    %474 = vmatpush2.msra.mxu0 0.0
    %475 = vmatprep.subr.mxu0 0.0
    %476 = vmatpush2.msra.mxu0 0.0
    %477 = vmatprep.subr.mxu0 0.0
    %478 = vmatpush2.msra.mxu0 0.0
    %479 = vmatprep.subr.mxu0 0.0
    %480 = vmatpush2.msra.mxu0 0.0
    %481 = vmatprep.subr.mxu0 0.0
    %482 = vmatpush2.msra.mxu0 0.0
    %483 = vmatprep.subr.mxu0 0.0
    %484 = vmatpush2.msra.mxu0 0.0
    %485 = vmatprep.mubr.f32.mxu0 0.0
    %486 = vmatmul.mubr.f32.gmra.mxu0 %v419
    %v487 = vpop.f32.mrf.mxu0
    %v488 = vadd.f32 0.0, %v487
    %v489 = vpop.f32.mrf.mxu0
    %490 = vdwg.mxu0
    %491 = vst.msk [vmem:[#allocation8] sm:$0xff] %vm72, %v412
    %492 = vst.msk [vmem:[#allocation8 + $0x8] sm:$0xff] %vm72, %v488
    // Predicated region
    $region30: #{tpu_custom_call.1} parent=1 // pred_check
      _
    $region31: #{tpu_custom_call.1} parent=1 // pred_check_branch
      %494 = sbr.rel (0) target = $region33
    $region32: #{tpu_custom_call.1} parent=1 // pred_region
      %s496 = ssub.s32 256, 256
      %497 = vsyncadd [#allocation4], %s496
      %s498 = sshll.u32 [#allocation8], 4
      %s499 = int_to_ptr.vmem [resolvable:$true] %s498
      %504 = dma.vmem_to_hbm [thread:$0]  %s499, 256, %s4, [#allocation4], 128, 128, 8
    $region33: #{tpu_custom_call.1} parent=1 // pred_fallthru
      _
    // Predicated region
    $region34: #{tpu_custom_call.1} parent=1 // pred_check
      _
    $region35: #{tpu_custom_call.1} parent=1 // pred_check_branch
      %506 = sbr.rel (0) target = $region37
    $region36: #{tpu_custom_call.1} parent=1 // pred_region
      %507 = dma.done [#allocation4], 256
    $region37: #{tpu_custom_call.1} parent=1 // pred_fallthru
      _
    %508 = vsyncpa [#allocation3], 1
    %509 = vsyncpa [#allocation6], 1
    %510 = vsyncpa [#allocation4], 1

</llo_original>
